<compile_context>
chip_gen: v5e
topology: v5e:2x2
jax: 0.10.0
libtpu: 0.0.40
codegen_flags: <defaults>
</compile_context>

<pallas_src>
import functools
import math

import jax
import jax.numpy as jnp
from jax import lax
from jax.experimental import pallas as pl
from jax.experimental.pallas import tpu as pltpu


# ---------------------------------------------------------------------------
# Tile-selection helpers
# ---------------------------------------------------------------------------
_TM_MAX, _TN_MAX, _TK_MAX = 512, 512, 1024      # streaming-tile caps
_M_ALIGN, _LANE = 16, 128                       # sublane (bf16) / lane align


def _round_up(v: int, m: int) -> int:
    return ((v + m - 1) // m) * m


@functools.lru_cache(maxsize=None)
def _vmem_capacity_bytes() -> int:
    """Per-TensorCore VMEM capacity (v5e/v6e: 128 MiB, v7x: 64 MiB)."""
    try:
        cap = getattr(pltpu.get_tpu_info(), "vmem_capacity_bytes", None)
        if cap:
            return int(cap)
    except Exception:
        pass
    return 64 * 1024 * 1024          # conservative fallback (v7x per-TC VMEM)


def _footprint_bytes(tm: int, tn: int, tk: int) -> int:
    """Conservative VMEM estimate: bf16 x/w tiles, f32 bias/out tiles, all
    counted double-buffered, plus one f32 out-tile temp for the MXU result."""
    return 2 * (tm * tk * 2 + tn * tk * 2 + tn * 4 + tm * tn * 4) + tm * tn * 4


def _select_tiles(B: int, N: int, K: int, budget: int):
    """Pick (tm, tn, tk). A tile equal to the full axis needs no alignment,
    no zero padding and no re-reads along that axis."""
    tm = B if B <= _TM_MAX else _TM_MAX

    # 1) Weight-stationary: keep the entire bf16 weight resident (tn=N, tk=K)
    #    whenever it fits the budget together with the x / out tiles. The
    #    weight index map is then constant -> a single HBM read of the weight
    #    independent of B (dominant HBM win on v5e/v6e; v7x gated by budget).
    for tm_ws in (tm, 256, 128):
        tm_ws = min(tm_ws, tm)
        if _footprint_bytes(tm_ws, N, K) <= budget:
            return tm_ws, N, K

    # 2) Streaming tiles: start large (per-step overhead and weight/x
    #    re-reads shrink with tile size); shrink K, then N, then M to fit.
    tn = N if N <= _TN_MAX else _TN_MAX
    tk = K if K <= _TK_MAX else _TK_MAX

    def shrink(t, full, align):
        if t >= full:                           # un-tiled -> start tiling
            t = _round_up(full, align)
        return max(align, (t // 2 // align) * align)

    for _ in range(32):
        if _footprint_bytes(tm, tn, tk) <= budget:
            break
        if tk > _LANE:
            tk = shrink(tk, K, _LANE)
        elif tn > _LANE:
            tn = shrink(tn, N, _LANE)
        elif tm > _M_ALIGN:
            tm = shrink(tm, B, _M_ALIGN)
        else:
            break
    return tm, tn, tk


def _maybe_split_for_megacore(tm: int, tn: int, B: int, N: int):
    """Megacore / v7x: the 2 TensorCores are fed by sharding 'parallel' grid
    axes, so a single-block (weight-stationary) config should still expose
    >= 2 blocks. Splitting M adds no HBM traffic (weight index unchanged)."""
    if pl.cdiv(B, tm) > 1 or pl.cdiv(N, tn) > 1:
        return tm, tn
    if B >= 2 * _M_ALIGN:
        return _round_up(pl.cdiv(B, 2), _M_ALIGN), tn
    if N >= 2 * _LANE:
        return tm, _round_up(pl.cdiv(N, 2), _LANE)
    return tm, tn


def _fix_user_tile(t: int, full: int, align: int) -> int:
    t = int(t)
    if t >= full:
        return full
    return max(align, _round_up(t, align))


# ---------------------------------------------------------------------------
# Kernel
# ---------------------------------------------------------------------------
def _fc_kernel(x_ref, w_ref, b_ref, o_ref, *, apply_relu: bool):
    # x_ref: (tm, tk) bf16 ; w_ref: (tn, tk) bf16 (PyTorch (OUT, IN) layout)
    # b_ref: (1, tn) f32   ; o_ref: (tm, tn) f32 -- doubles as the resident
    # f32 accumulator (its block index (i, j) is constant across the K axis),
    # so no separate VMEM scratch and no final tile copy are needed.
    k = pl.program_id(2)

    @pl.when(k == 0)
    def _():
        o_ref[...] = jnp.zeros_like(o_ref)

    # x @ W^T without materializing a transpose: contract the last dim of both
    # operands. The MXU consumes the transposed RHS natively (same pattern as
    # flash-attention's q.k^T), so no per-step XLU vxpose steals MXU slots.
    o_ref[...] += lax.dot_general(
        x_ref[...],
        w_ref[...],
        dimension_numbers=(((1,), (1,)), ((), ())),
        preferred_element_type=jnp.float32,
    )

    @pl.when(k == pl.num_programs(2) - 1)
    def _():
        y = o_ref[...] + b_ref[...]             # bias once, in f32
        if apply_relu:
            y = jnp.maximum(y, 0.0)
        o_ref[...] = y


# ---------------------------------------------------------------------------
# Wrapper
# ---------------------------------------------------------------------------
@functools.partial(jax.jit, static_argnames=("relu", "tm", "tn", "tk"))
def fc_forward(x, weight, bias, *, relu=True, tm=None, tn=None, tk=None):
    """Forward pass of FC:  ReLU(x @ weight^T + bias)  (ReLU optional).

    x:      (B, in_features)              f32 or bf16
    weight: (out_features, in_features)   f32 or bf16 (PyTorch nn.Linear layout)
    bias:   (out_features,)               f32
    returns (B, out_features) float32 (matmul in bf16 on the MXU;
    accumulation, bias and ReLU in f32; output dtype is pinned to f32).

    tm/tn/tk override the generation-aware automatic tile selection.
    """
    B, K = x.shape
    N, K2 = weight.shape
    assert K == K2, "weight in_features mismatch"
    assert bias.shape == (N,)

    # ---- generation-aware VMEM budget & tile selection --------------------
    vmem_cap = _vmem_capacity_bytes()
    vmem_limit = min(int(vmem_cap * 0.85), 100 * 1024 * 1024)
    budget = int(vmem_limit * 0.8)

    a_tm, a_tn, a_tk = _select_tiles(B, N, K, budget)
    a_tm, a_tn = _maybe_split_for_megacore(a_tm, a_tn, B, N)
    tm = a_tm if tm is None else _fix_user_tile(tm, B, _M_ALIGN)
    tn = a_tn if tn is None else _fix_user_tile(tn, N, _LANE)
    tk = a_tk if tk is None else _fix_user_tile(tk, K, _LANE)

    # ---- operands: bf16 for the MXU (skip the cast if the caller already
    # persists bf16 weights/activations), f32 bias ---------------------------
    x_p = x if x.dtype == jnp.bfloat16 else x.astype(jnp.bfloat16)
    w_p = weight if weight.dtype == jnp.bfloat16 else weight.astype(jnp.bfloat16)
    b_p = bias.astype(jnp.float32).reshape(1, N)

    # Only the contraction axis ever needs zero padding: garbage in partial
    # M / N edge blocks feeds rows / columns that are never written back, but
    # garbage in a K tail would corrupt the accumulation.
    K_pad = K if tk >= K else _round_up(K, tk)
    if K_pad != K:
        x_p = jnp.pad(x_p, ((0, 0), (0, K_pad - K)))
        w_p = jnp.pad(w_p, ((0, 0), (0, K_pad - K)))

    grid = (pl.cdiv(B, tm), pl.cdiv(N, tn), K_pad // tk)

    # 3-deep weight buffering on 128-MiB-VMEM chips (v5e/v6e) when the weight
    # tile is actually re-streamed; keep the default 2 on v7x (64 MiB).
    w_index = lambda i, j, k: (j, k)
    w_spec = pl.BlockSpec((tn, tk), w_index)
    w_is_resident = tn >= N and tk >= K_pad
    if (not w_is_resident and vmem_cap > 96 * 1024 * 1024
            and _footprint_bytes(tm, tn, tk) + tn * tk * 2 <= budget):
        try:
            w_spec = pl.BlockSpec((tn, tk), w_index,
                                  pipeline_mode=pl.Buffered(3))
        except Exception:
            pass   # API variant without pipeline_mode: fall back to default

    kernel = functools.partial(_fc_kernel, apply_relu=relu)

    return pl.pallas_call(
        kernel,
        out_shape=jax.ShapeDtypeStruct((B, N), jnp.float32),
        grid_spec=pltpu.PrefetchScalarGridSpec(
            num_scalar_prefetch=0,
            grid=grid,
            in_specs=[
                # x tile streams over K for a fixed M row-block
                pl.BlockSpec((tm, tk), lambda i, j, k: (i, k)),
                # weight tile, PyTorch (OUT, IN) layout: rows->N, cols->K;
                # DMA'd exactly once when tn==N and tk==K_pad (index constant)
                w_spec,
                # bias: one lane strip per N tile
                pl.BlockSpec((1, tn), lambda i, j, k: (0, j)),
            ],
            out_specs=pl.BlockSpec((tm, tn), lambda i, j, k: (i, j)),
        ),
        compiler_params=pltpu.CompilerParams(
            dimension_semantics=("parallel", "parallel", "arbitrary"),
            vmem_limit_bytes=vmem_limit,
        ),
    )(x_p, w_p, b_p)


# ---------------------------------------------------------------------------
# Init / reference / tests
# ---------------------------------------------------------------------------
def init_fc_params(key, in_features, out_features):
    """torch.nn.Linear default init: U(-1/sqrt(in), 1/sqrt(in))."""
    kw, kb = jax.random.split(key)
    bound = 1.0 / math.sqrt(in_features)
    weight = jax.random.uniform(kw, (out_features, in_features), jnp.float32,
                                -bound, bound)
    bias = jax.random.uniform(kb, (out_features,), jnp.float32, -bound, bound)
    return weight, bias


def _ref_forward(x, weight, bias, relu):
    # Reference with the same bf16-product / f32-accumulate numerics.
    y = jnp.dot(x.astype(jnp.bfloat16), weight.astype(jnp.bfloat16).T,
                preferred_element_type=jnp.float32) + bias
    if relu:
        y = jnp.maximum(y, 0.0)
    return y


if __name__ == "__main__":
    key = jax.random.PRNGKey(0)
    k_x1, k_p1, k_x2, k_p2 = jax.random.split(key, 4)

    # --- Test 1: small single-block FC with ReLU (auto tiles, grid (1,1,1))
    B1, IN1, OUT1 = 8, 32, 64
    x1 = jax.random.normal(k_x1, (B1, IN1), jnp.float32)
    w1, b1 = init_fc_params(k_p1, IN1, OUT1)
    y1 = jax.block_until_ready(fc_forward(x1, w1, b1, relu=True))
    assert y1.shape == (B1, OUT1) and y1.dtype == jnp.float32
    assert jnp.allclose(y1, _ref_forward(x1, w1, b1, True), atol=2e-3, rtol=2e-3)
    # loose check vs a full-precision f32 reference too
    assert jnp.allclose(y1, jnp.maximum(x1 @ w1.T + b1, 0.0),
                        atol=5e-2, rtol=5e-2)

    # --- Test 2: auto path with non-multiple-of-128 dims: weight-stationary,
    #     megacore M split -> partial M edge block, with ReLU
    B2, IN2, OUT2 = 48, 200, 300
    x2 = jax.random.normal(k_x2, (B2, IN2), jnp.float32)
    w2, b2 = init_fc_params(k_p2, IN2, OUT2)
    y2 = jax.block_until_ready(fc_forward(x2, w2, b2, relu=True))
    assert y2.shape == (B2, OUT2)
    assert jnp.allclose(y2, _ref_forward(x2, w2, b2, True), atol=2e-3, rtol=2e-3)

    # --- Test 3: forced multi-block (M, N, K) grid: K zero padding, partial
    #     N edge block, 3-deep weight buffering on v5e/v6e, no ReLU
    y3 = jax.block_until_ready(
        fc_forward(x2, w2, b2, relu=False, tm=16, tn=128, tk=128))
    assert y3.shape == (B2, OUT2)
    assert jnp.allclose(y3, _ref_forward(x2, w2, b2, False), atol=2e-3, rtol=2e-3)

    print("KERNEL_OK")
</pallas_src>

<mosaic_0001>
module attributes {stable_mosaic.version = 11 : i64} {
  func.func @_fc_kernel(%arg0: i32, %arg1: i32, %arg2: i32, %arg3: memref<8x32xbf16, #tpu.memory_space<vmem>>, %arg4: memref<64x32xbf16, #tpu.memory_space<vmem>>, %arg5: memref<1x64xf32, #tpu.memory_space<vmem>>, %arg6: memref<8x64xf32, #tpu.memory_space<vmem>>) attributes {dimension_semantics = [#tpu.dimension_semantics<parallel>, #tpu.dimension_semantics<parallel>, #tpu.dimension_semantics<arbitrary>], iteration_bounds = array<i64: 1, 1, 1>, scalar_prefetch = 0 : i64, scratch_operands = 0 : i64, tpu.core_type = #tpu.core_type<tc>, window_params = [{transform_indices = @transform_0, window_bounds = array<i64: 8, 32>}, {transform_indices = @transform_1, window_bounds = array<i64: 64, 32>}, {transform_indices = @transform_2, window_bounds = array<i64: 1, 64>}, {transform_indices = @transform_3, window_bounds = array<i64: 8, 64>}]} {
    %c0_i32 = arith.constant 0 : i32
    %0 = arith.cmpi eq, %arg2, %c0_i32 : i32
    %1 = arith.extui %0 : i1 to i32
    %c0_i32_0 = arith.constant 0 : i32
    %2 = arith.cmpi ne, %1, %c0_i32_0 : i32
    scf.if %2 {
      %cst_10 = arith.constant 0.000000e+00 : f32
      %12 = vector.broadcast %cst_10 : f32 to vector<8x64xf32>
      %c0_11 = arith.constant 0 : index
      %c0_12 = arith.constant 0 : index
      %13 = vector.load %arg6[%c0_11, %c0_12] : memref<8x64xf32, #tpu.memory_space<vmem>>, vector<8x64xf32>
      tpu.vector_store %arg6[%c0_11, %c0_12], %12 {strides = array<i32>} : memref<8x64xf32, #tpu.memory_space<vmem>>, vector<8x64xf32>,
    } else {
    }
    %c0 = arith.constant 0 : index
    %c0_1 = arith.constant 0 : index
    %3 = vector.load %arg6[%c0, %c0_1] : memref<8x64xf32, #tpu.memory_space<vmem>>, vector<8x64xf32>
    %c0_2 = arith.constant 0 : index
    %c0_3 = arith.constant 0 : index
    %4 = vector.load %arg3[%c0_2, %c0_3] : memref<8x32xbf16, #tpu.memory_space<vmem>>, vector<8x32xbf16>
    %c0_4 = arith.constant 0 : index
    %c0_5 = arith.constant 0 : index
    %5 = vector.load %arg4[%c0_4, %c0_5] : memref<64x32xbf16, #tpu.memory_space<vmem>>, vector<64x32xbf16>
    %cst = arith.constant dense<0.000000e+00> : vector<8x64xf32>
    %6 = tpu.matmul %4, %5, %cst {dimension_numbers = #tpu.dot_dimension_numbers<[1], [1], [0], [0], [0, 0, 1, 0], [], []>} : vector<8x32xbf16>, vector<64x32xbf16>, vector<8x64xf32> -> vector<8x64xf32>
    %7 = arith.addf %3, %6 : vector<8x64xf32>
    %c0_6 = arith.constant 0 : index
    %c0_7 = arith.constant 0 : index
    %8 = vector.load %arg6[%c0_6, %c0_7] : memref<8x64xf32, #tpu.memory_space<vmem>>, vector<8x64xf32>
    tpu.vector_store %arg6[%c0_6, %c0_7], %7 {strides = array<i32>} : memref<8x64xf32, #tpu.memory_space<vmem>>, vector<8x64xf32>,
    %c0_i32_8 = arith.constant 0 : i32
    %9 = arith.cmpi eq, %arg2, %c0_i32_8 : i32
    %10 = arith.extui %9 : i1 to i32
    %c0_i32_9 = arith.constant 0 : i32
    %11 = arith.cmpi ne, %10, %c0_i32_9 : i32
    scf.if %11 {
      %c0_10 = arith.constant 0 : index
      %c0_11 = arith.constant 0 : index
      %12 = vector.load %arg6[%c0_10, %c0_11] : memref<8x64xf32, #tpu.memory_space<vmem>>, vector<8x64xf32>
      %c0_12 = arith.constant 0 : index
      %c0_13 = arith.constant 0 : index
      %13 = vector.load %arg5[%c0_12, %c0_13] : memref<1x64xf32, #tpu.memory_space<vmem>>, vector<1x64xf32>
      %14 = vector.broadcast %13 : vector<1x64xf32> to vector<8x64xf32>
      %15 = arith.addf %12, %14 : vector<8x64xf32>
      %cst_14 = arith.constant 0.000000e+00 : f32
      %16 = vector.broadcast %cst_14 : f32 to vector<8x64xf32>
      %17 = arith.maximumf %15, %16 : vector<8x64xf32>
      %c0_15 = arith.constant 0 : index
      %c0_16 = arith.constant 0 : index
      %18 = vector.load %arg6[%c0_15, %c0_16] : memref<8x64xf32, #tpu.memory_space<vmem>>, vector<8x64xf32>
      tpu.vector_store %arg6[%c0_15, %c0_16], %17 {strides = array<i32>} : memref<8x64xf32, #tpu.memory_space<vmem>>, vector<8x64xf32>,
    } else {
    }
    return
  }
  func.func @transform_0(%arg0: i32, %arg1: i32, %arg2: i32) -> (i32, i32) {
    %c0_i32 = arith.constant 0 : i32
    return %arg0, %arg2 : i32, i32
  }
  func.func @transform_1(%arg0: i32, %arg1: i32, %arg2: i32) -> (i32, i32) {
    %c0_i32 = arith.constant 0 : i32
    return %arg1, %arg2 : i32, i32
  }
  func.func @transform_2(%arg0: i32, %arg1: i32, %arg2: i32) -> (i32, i32) {
    %c0_i32 = arith.constant 0 : i32
    %c0_i32_0 = arith.constant 0 : i32
    return %c0_i32, %arg1 : i32, i32
  }
  func.func @transform_3(%arg0: i32, %arg1: i32, %arg2: i32) -> (i32, i32) {
    %c0_i32 = arith.constant 0 : i32
    return %arg0, %arg1 : i32, i32
  }
}

</mosaic_0001>

<llo_original>
// kernel: fc_forward.1
$region0: #{fc_forward.1}
  #allocation0 [shape = 'u32[]', space=smem, size = 0x4, offset = 0x4, fixed_abs, tag = 'smem constant byte address 0x4 - core index']
  #allocation1 [shape = 'u32[72,128]{1,0:T(1,128)}', space=vmem, size = 0x9000, scoped, tag = 'internal scratch']
  %s0 = inlined_call_operand.vmem [shape: bf16[8,32], index: 0, kind: input, shape index: {}]
  %s1 = inlined_call_operand.vmem [shape: bf16[64,32], index: 1, kind: input, shape index: {}]
  %s2 = inlined_call_operand.vmem [shape: f32[1,64], index: 2, kind: input, shape index: {}]
  %s3 = inlined_call_operand.hbm [shape: f32[8,64], index: 3, kind: output, shape index: {}]
  %s4 = sld [smem:[#allocation0]]
  $region30: #{fc_forward.1} parent=0
    _
  %s6 = ssub.s32 1, %s4
  %s7 = scalar_select 0, %s6, %s4
  $region1: #{fc_forward.1} parent=0
    #allocation2 [shape = 'u8[4096]{0}', space=vmem, size = 0x1000, scoped, tag = 'output window, operand 0, single buffered']
    #allocation3 [shape = 's32[1]{0}', space=sflag, size = 0x4, scoped, tag = 'scoped memory for fc_forward.1']
    %8 = vsyncpa [#allocation3], 0
    // Predicated region
    $region2: #{fc_forward.1} parent=1 // pred_check
      _
    $region3: #{fc_forward.1} parent=1 // pred_check_branch
      %10 = sbr.rel (0) target = $region5
    $region4: #{fc_forward.1} parent=1 // pred_region
      _
    $region5: #{fc_forward.1} parent=1 // pred_fallthru
      _
    // Predicated region
    $region6: #{fc_forward.1} parent=1 // pred_check
      _
    $region7: #{fc_forward.1} parent=1 // pred_check_branch
      %12 = sbr.rel (0) target = $region9
    $region8: #{fc_forward.1} parent=1 // pred_region
      _
    $region9: #{fc_forward.1} parent=1 // pred_fallthru
      _
    // Predicated region
    $region10: #{fc_forward.1} parent=1 // pred_check
      _
    $region11: #{fc_forward.1} parent=1 // pred_check_branch
      %14 = sbr.rel (0) target = $region13
    $region12: #{fc_forward.1} parent=1 // pred_region
      _
    $region13: #{fc_forward.1} parent=1 // pred_fallthru
      _
    %p16 = scmp.eq.s32.totalorder 0, 0
    // Predicated region
    $region14: #{fc_forward.1} parent=1 // pred_check
      %p17 = pneg %p16
    $region15: #{fc_forward.1} parent=1 // pred_check_branch
      %19 = sbr.rel (%p17) target = $region17
    $region16: #{fc_forward.1} parent=1 // pred_region
      %vm20 = vcmask 523264
      %21 = vst.msk [vmem:[#allocation2] sm:$0xff] %vm20, 0.0
    $region17: #{fc_forward.1} parent=1 // pred_fallthru
      _
    %v22 = vld [vmem:[#allocation2] sm:$0xff]
    %v23 = vld [vmem:[%s0] sm:$0xf]
    %v24 = vld [vmem:[%s1] sm:$0xf]
    %v25 = vld [vmem:[%s1 + $0x4] sm:$0xf]
    %v26 = vld [vmem:[%s1 + $0x8] sm:$0xf]
    %v27 = vld [vmem:[%s1 + $0xc] sm:$0xf]
    %v28 = vld [vmem:[%s1 + $0x10] sm:$0xf]
    %v29 = vld [vmem:[%s1 + $0x14] sm:$0xf]
    %v30 = vld [vmem:[%s1 + $0x18] sm:$0xf]
    %v31 = vld [vmem:[%s1 + $0x1c] sm:$0xf]
    %v40 = vunpack.c.l.b16 %v24
    %v41 = vunpack.c.l.b16 %v25
    %v42 = vunpack.c.l.b16 %v26
    %v43 = vunpack.c.l.b16 %v27
    %v44 = vunpack.c.l.b16 %v28
    %v45 = vunpack.c.l.b16 %v29
    %v46 = vunpack.c.l.b16 %v30
    %v47 = vunpack.c.l.b16 %v31
    %v48 = vpack.c.b16 %v41, %v40
    %v49 = vpack.c.b16 %v43, %v42
    %v50 = vpack.c.b16 %v45, %v44
    %v51 = vpack.c.b16 %v47, %v46
    %vm52 = vcmask 261120
    %v54 = vsel %vm52, %v23, 0
    %v57 = vsel %vm52, %v48, 0
    %v60 = vsel %vm52, %v49, 0
    %v63 = vsel %vm52, %v50, 0
    %v66 = vsel %vm52, %v51, 0
    %68 = vmatpush.bf16.xpose.msra.mxu0 0
    %69 = vmatpush.bf16.xpose.msra.mxu0 0
    %70 = vmatpush.bf16.xpose.msra.mxu0 0
    %71 = vmatpush.bf16.xpose.msra.mxu0 0
    %72 = vmatpush.bf16.xpose.msra.mxu0 %v66
    %73 = vmatpush.bf16.xpose.msra.mxu0 %v63
    %74 = vmatpush.bf16.xpose.msra.mxu0 %v60
    %75 = vmatpush.bf16.xpose.msra.mxu0 %v57
    %76 = vmatmul.bf16.gmra.mxu0 %v54
    %v77 = vpop.f32.mrf.mxu0
    %v78 = vadd.f32 0.0, %v77
    %v79 = vpop.f32.mrf.mxu0
    %80 = vdwg.mxu0
    %v81 = vadd.f32 %v22, %v78
    %vm82 = vcmask 523264
    %83 = vst.msk [vmem:[#allocation2] sm:$0xff] %vm82, %v81
    // Predicated region
    $region18: #{fc_forward.1} parent=1 // pred_check
      %p84 = pneg %p16
    $region19: #{fc_forward.1} parent=1 // pred_check_branch
      %86 = sbr.rel (%p84) target = $region21
    $region20: #{fc_forward.1} parent=1 // pred_region
      %v87 = vld [vmem:[#allocation2] sm:$0xff]
      %v88 = vld [vmem:[%s2] sm:$0x1]
      %v90 = vperm.slane %v88, 0
      %v92 = vadd.f32 %v87, %v90
      %v93 = vmax.f32 %v92, 0.0
      %94 = vst.msk [vmem:[#allocation2] sm:$0xff] %vm82, %v93
    $region21: #{fc_forward.1} parent=1 // pred_fallthru
      _
    // Predicated region
    $region22: #{fc_forward.1} parent=1 // pred_check
      _
    $region23: #{fc_forward.1} parent=1 // pred_check_branch
      %96 = sbr.rel (0) target = $region25
    $region24: #{fc_forward.1} parent=1 // pred_region
      %98 = vsyncadd [#allocation3], 0
      %s100 = sshll.u32 [#allocation2], 4
      %s101 = int_to_ptr.vmem [resolvable:$true] %s100
      %s102 = sshll.u32 %s3, 4
      %s103 = int_to_ptr.hbm [resolvable:$true] %s102
      %105 = dma.vmem_to_hbm [thread:$0]  %s101, 128, %s103, [#allocation3]
    $region25: #{fc_forward.1} parent=1 // pred_fallthru
      _
    // Predicated region
    $region26: #{fc_forward.1} parent=1 // pred_check
      _
    $region27: #{fc_forward.1} parent=1 // pred_check_branch
      %107 = sbr.rel (0) target = $region29
    $region28: #{fc_forward.1} parent=1 // pred_region
      %109 = dma.done [#allocation3], 128
    $region29: #{fc_forward.1} parent=1 // pred_fallthru
      _
    %110 = vsyncpa [#allocation3], 1

</llo_original>
